<compile_context>
chip_gen: v7x
topology: tpu7x:2x2x1
jax: 0.10.0
libtpu: 0.0.40
codegen_flags: <defaults>
</compile_context>

<pallas_src>
import math

import jax
import jax.numpy as jnp
import numpy as np
from jax.experimental import pallas as pl
from jax.experimental.pallas import tpu as pltpu

# ~8 MiB f32 tiles: double-buffered input + output ~= 32 MiB (+ tiny params),
# under the 48 MiB scoped limit below and v7x's 64 MiB physical VMEM, while
# cutting the fixed per-grid-step overhead to a few % of DMA time even at
# v7x's ~3.2 TB/s.
_TARGET_TILE_BYTES = 8 * 1024 * 1024
_VMEM_LIMIT_BYTES = 48 << 20  # < 64 MiB v7x physical; << 128 MiB v5e/v6e.


def _affine_map_kernel(u_ref, p_ref, x_ref):
    # p_ref is the merged (2, W) parameter block: row 0 = lo, row 1 = width.
    lo = p_ref[0:1, :]
    width = p_ref[1:2, :]
    # x = lo + u * (hi - lo); (1, W) params broadcast over (rows, W) samples.
    x_ref[...] = lo + u_ref[...] * width


def _round_up(x, m):
    return ((x + m - 1) // m) * m


def _pick_tile_rows(total_rows, row_width_elems):
    """Rows per tile: multiple of 8, sized by the *physical* padded footprint."""
    if total_rows <= 8:
        return total_rows
    # A (R, W) f32 VMEM block physically occupies round_up(W,128) lanes per
    # row — account for that so small-W fallback blocks never blow VMEM.
    padded_width = _round_up(row_width_elems, 128)
    budget_rows = max(8, _TARGET_TILE_BYTES // (padded_width * 4))
    rows = min(total_rows, budget_rows)
    # Keep >= 2 grid steps so v7x's two TensorCores both get work
    # (dimension_semantics=("parallel",)); harmless on v5e/v6e.
    if total_rows > 16:
        half = _round_up(pl.cdiv(total_rows, 2), 8)
        rows = min(rows, half)
    rows = max(8, (rows // 8) * 8)
    return min(rows, total_rows)


def _call_affine(u2d, params, tile_rows):
    m, w = u2d.shape
    grid = (pl.cdiv(m, tile_rows),)
    return pl.pallas_call(
        _affine_map_kernel,
        out_shape=jax.ShapeDtypeStruct((m, w), jnp.float32),
        grid=grid,
        in_specs=[
            pl.BlockSpec((tile_rows, w), lambda i: (i, 0)),  # tiled samples
            pl.BlockSpec((2, w), lambda i: (0, 0)),          # resident params
        ],
        out_specs=pl.BlockSpec((tile_rows, w), lambda i: (i, 0)),
        compiler_params=pltpu.CompilerParams(
            dimension_semantics=("parallel",),   # v7x: shard tiles over 2 TCs
            vmem_limit_bytes=_VMEM_LIMIT_BYTES,
        ),
    )(u2d, params)


def _choose_packed_width(d):
    """Lane-dense packed row width: lcm(d, 128) scaled into ~[512, 1024]."""
    if d % 128 == 0:
        return None  # already lane-dense in its natural (N, D) layout
    L = (d * 128) // math.gcd(d, 128)  # lcm(d, 128)
    while L < 512:
        L *= 2
    if L > 8192:
        return None  # pathological D; fallback accounting handles it safely
    return L


def map_forward(u, bounds):
    """Apply the bounds map.  u: [N, D] in [0,1]; bounds: [D, 2] -> x: [N, D]."""
    u = jnp.asarray(u, dtype=jnp.float32)
    bounds = jnp.asarray(bounds, dtype=jnp.float32)
    n, d = u.shape
    assert bounds.shape == (d, 2), "bounds must be [dim, 2]"

    lo = bounds[:, 0]
    width = bounds[:, 1] - bounds[:, 0]

    total = n * d
    L = _choose_packed_width(d)
    if L is not None and total >= L:
        # Packed path: flat stream -> (m, L) lane-dense rows.  Since L % d == 0
        # every packed row starts at a sample boundary, so the per-lane params
        # are just lo/width tiled L//d times.
        m = pl.cdiv(total, L)
        pad = m * L - total
        flat = u.reshape(-1)  # metadata-only for row-major inputs
        if pad:
            flat = jnp.pad(flat, (0, pad))  # one extra pass only for ragged tails
        u_packed = flat.reshape(m, L)
        reps = L // d
        params = jnp.stack([jnp.tile(lo, reps), jnp.tile(width, reps)])  # (2, L)
        tile_rows = _pick_tile_rows(m, L)
        x_packed = _call_affine(u_packed, params, tile_rows)
        x_flat = x_packed.reshape(-1)
        if pad:
            x_flat = x_flat[:total]
        return x_flat.reshape(n, d)

    # Fallback (tiny input or D already a multiple of 128): tile the batch
    # axis, keep full D as the last (un-tiled) block dim so the (8,128)
    # divisibility rule is satisfied.
    params = jnp.stack([lo, width])  # (2, D)
    tile_rows = _pick_tile_rows(n, d)
    return _call_affine(u, params, tile_rows)


class MapPallas:
    """Mirror of the PyTorch `Map` module, forward implemented via Pallas."""

    def __init__(self, bounds):
        if isinstance(bounds, (list, np.ndarray)):
            self.bounds = jnp.asarray(np.asarray(bounds), dtype=jnp.float32)
        else:
            raise ValueError("Unsupported map specification")
        self.dim = self.bounds.shape[0]

    def forward(self, u):
        return map_forward(u, self.bounds)

    def __call__(self, u):
        return self.forward(u)


if __name__ == "__main__":
    # Deterministic parameters: a small box in 4 dimensions.
    bounds = [[-1.0, 1.0], [0.0, 2.0], [-3.0, 3.0], [5.0, 10.0]]  # [dim=4, 2]
    m = MapPallas(bounds)

    key0, key1, key2 = jax.random.split(jax.random.PRNGKey(0), 3)

    # Path 1: packed, no tail padding (2048*4 = 8192 = 16 rows of L=512).
    u_packed = jax.random.uniform(key0, (2048, m.dim), dtype=jnp.float32)
    x_packed = m(u_packed)

    # Path 2: packed with ragged tail padding (300*4 = 1200, pad to 3*512).
    u_ragged = jax.random.uniform(key1, (300, m.dim), dtype=jnp.float32)
    x_ragged = m(u_ragged)

    # Path 3: tiny-input fallback (7*4 = 28 < L).
    u_small = jax.random.uniform(key2, (7, m.dim), dtype=jnp.float32)
    x_small = m(u_small)

    jax.block_until_ready((x_packed, x_ragged, x_small))

    # Reference check against plain JAX.
    b = jnp.asarray(np.asarray(bounds), dtype=jnp.float32)
    lo_ref = b[:, 0][None, :]
    w_ref = (b[:, 1] - b[:, 0])[None, :]
    np.testing.assert_allclose(
        np.asarray(x_packed), np.asarray(lo_ref + u_packed * w_ref),
        rtol=1e-6, atol=1e-6)
    np.testing.assert_allclose(
        np.asarray(x_ragged), np.asarray(lo_ref + u_ragged * w_ref),
        rtol=1e-6, atol=1e-6)
    np.testing.assert_allclose(
        np.asarray(x_small), np.asarray(lo_ref + u_small * w_ref),
        rtol=1e-6, atol=1e-6)

    print("KERNEL_OK")
</pallas_src>

<mosaic_0001>
module attributes {stable_mosaic.version = 11 : i64} {
  func.func @_affine_map_kernel(%arg0: i32, %arg1: memref<16x512xf32, #tpu.memory_space<vmem>>, %arg2: memref<2x512xf32, #tpu.memory_space<vmem>>, %arg3: memref<16x512xf32, #tpu.memory_space<vmem>>) attributes {dimension_semantics = [#tpu.dimension_semantics<parallel>], iteration_bounds = array<i64: 1>, scalar_prefetch = 0 : i64, scratch_operands = 0 : i64, tpu.core_type = #tpu.core_type<tc>, window_params = [{transform_indices = @transform_0, window_bounds = array<i64: 16, 512>}, {pipeline_mode = #tpu.pipeline_mode<synchronous>, transform_indices = @transform_1, window_bounds = array<i64: 2, 512>}, {transform_indices = @transform_2, window_bounds = array<i64: 16, 512>}]} {
    %c0 = arith.constant 0 : index
    %c0_0 = arith.constant 0 : index
    %0 = vector.load %arg2[%c0, %c0_0] : memref<2x512xf32, #tpu.memory_space<vmem>>, vector<1x512xf32>
    %c1 = arith.constant 1 : index
    %c0_1 = arith.constant 0 : index
    %1 = vector.load %arg2[%c1, %c0_1] : memref<2x512xf32, #tpu.memory_space<vmem>>, vector<1x512xf32>
    %c0_2 = arith.constant 0 : index
    %c0_3 = arith.constant 0 : index
    %2 = vector.load %arg1[%c0_2, %c0_3] : memref<16x512xf32, #tpu.memory_space<vmem>>, vector<16x512xf32>
    %3 = vector.broadcast %1 : vector<1x512xf32> to vector<16x512xf32>
    %4 = arith.mulf %2, %3 : vector<16x512xf32>
    %5 = vector.broadcast %0 : vector<1x512xf32> to vector<16x512xf32>
    %6 = arith.addf %5, %4 : vector<16x512xf32>
    %c0_4 = arith.constant 0 : index
    %c0_5 = arith.constant 0 : index
    %7 = vector.load %arg3[%c0_4, %c0_5] : memref<16x512xf32, #tpu.memory_space<vmem>>, vector<16x512xf32>
    tpu.vector_store %arg3[%c0_4, %c0_5], %6 {strides = array<i32>} : memref<16x512xf32, #tpu.memory_space<vmem>>, vector<16x512xf32>,
    return
  }
  func.func @transform_0(%arg0: i32) -> (i32, i32) {
    %c0_i32 = arith.constant 0 : i32
    %c0_i32_0 = arith.constant 0 : i32
    return %arg0, %c0_i32 : i32, i32
  }
  func.func @transform_1(%arg0: i32) -> (i32, i32) {
    %c0_i32 = arith.constant 0 : i32
    %c0_i32_0 = arith.constant 0 : i32
    %c0_i32_1 = arith.constant 0 : i32
    return %c0_i32, %c0_i32_0 : i32, i32
  }
  func.func @transform_2(%arg0: i32) -> (i32, i32) {
    %c0_i32 = arith.constant 0 : i32
    %c0_i32_0 = arith.constant 0 : i32
    return %arg0, %c0_i32 : i32, i32
  }
}

</mosaic_0001>

<llo_original>
// kernel: tpu_custom_call.1
$region0: #{tpu_custom_call.1}
  #allocation0 [shape = 'u32[]', space=smem, size = 0x4, offset = 0x4, fixed_abs, tag = 'smem constant byte address 0x4 - core index']
  #allocation1 [shape = 'u32[144,128]{1,0:T(1,128)}', space=vmem, size = 0x12000, scoped, tag = 'internal scratch']
  %s0 = inlined_call_operand.hbm [shape: f32[16,512], index: 0, kind: input, shape index: {}]
  %s1 = inlined_call_operand.hbm [shape: f32[2,512], index: 1, kind: input, shape index: {}]
  %s2 = inlined_call_operand.hbm [shape: f32[16,512], index: 2, kind: output, shape index: {}]
  %s3 = sld [smem:[#allocation0]]
  $region26: #{tpu_custom_call.1} parent=0
    _
  %s5 = ssub.s32 1, %s3
  %s6 = scalar_select 0, %s5, %s3
  $region1: #{tpu_custom_call.1} parent=0
    #allocation2 [shape = 'u8[32768]{0}', space=vmem, size = 0x8000, scoped, tag = 'input window, operand 0, single buffered']
    #allocation3 [shape = 's32[1]{0}', space=sflag, size = 0x4, scoped, tag = 'scoped memory for tpu_custom_call.1']
    #allocation4 [shape = 's32[1]{0}', space=sflag, size = 0x4, scoped, tag = 'scoped memory for tpu_custom_call.1']
    #allocation5 [shape = 'u8[4096]{0}', space=vmem, size = 0x1000, scoped, tag = 'input window, operand 1, single buffered']
    #allocation6 [shape = 's32[1]{0}', space=sflag, size = 0x4, scoped, tag = 'scoped memory for tpu_custom_call.1']
    #allocation7 [shape = 'u8[32768]{0}', space=vmem, size = 0x8000, scoped, tag = 'output window, operand 0, single buffered']
    %7 = vsyncpa [#allocation3], 0
    %8 = vsyncpa [#allocation6], 0
    %9 = vsyncpa [#allocation4], 0
    // Predicated region
    $region2: #{tpu_custom_call.1} parent=1 // pred_check
      _
    $region3: #{tpu_custom_call.1} parent=1 // pred_check_branch
      %11 = sbr.rel (0) target = $region5
    $region4: #{tpu_custom_call.1} parent=1 // pred_region
      %s13 = ssub.s32 1024, 1024
      %14 = vsyncadd [#allocation3], %s13
      %s15 = sshll.u32 [#allocation2], 4
      %s16 = int_to_ptr.vmem [resolvable:$true] %s15
      %21 = dma.hbm_to_vmem [thread:$0]  %s0, 1024, %s16, [#allocation3], 512, 512, 32
    $region5: #{tpu_custom_call.1} parent=1 // pred_fallthru
      _
    // Predicated region
    $region6: #{tpu_custom_call.1} parent=1 // pred_check
      _
    $region7: #{tpu_custom_call.1} parent=1 // pred_check_branch
      %23 = sbr.rel (0) target = $region9
    $region8: #{tpu_custom_call.1} parent=1 // pred_region
      %s25 = ssub.s32 128, 128
      %26 = vsyncadd [#allocation6], %s25
      %s28 = sshll.u32 [#allocation5], 4
      %s29 = int_to_ptr.vmem [resolvable:$true] %s28
      %31 = dma.hbm_to_vmem [thread:$0]  %s1, 128, %s29, [#allocation6]
    $region9: #{tpu_custom_call.1} parent=1 // pred_fallthru
      _
    // Predicated region
    $region10: #{tpu_custom_call.1} parent=1 // pred_check
      _
    $region11: #{tpu_custom_call.1} parent=1 // pred_check_branch
      %33 = sbr.rel (0) target = $region13
    $region12: #{tpu_custom_call.1} parent=1 // pred_region
      %34 = dma.done [#allocation3], 1024
    $region13: #{tpu_custom_call.1} parent=1 // pred_fallthru
      _
    // Predicated region
    $region14: #{tpu_custom_call.1} parent=1 // pred_check
      _
    $region15: #{tpu_custom_call.1} parent=1 // pred_check_branch
      %36 = sbr.rel (0) target = $region17
    $region16: #{tpu_custom_call.1} parent=1 // pred_region
      %37 = dma.done [#allocation6], 128
    $region17: #{tpu_custom_call.1} parent=1 // pred_fallthru
      _
    %v38 = vld [vmem:[#allocation5] ss:$2 sm:$0xf]
    %s39 = scalar_lea.vmem [#allocation5], 1
    %v40 = vld [vmem:[%s39] ss:$2 sm:$0xf]
    %v41 = vld [vmem:[#allocation2] sm:$0xff]
    %v42 = vld [vmem:[#allocation2 + $0x8] sm:$0xff]
    %v43 = vld [vmem:[#allocation2 + $0x10] sm:$0xff]
    %v44 = vld [vmem:[#allocation2 + $0x18] sm:$0xff]
    %v45 = vld [vmem:[#allocation2 + $0x20] sm:$0xff]
    %v46 = vld [vmem:[#allocation2 + $0x28] sm:$0xff]
    %v47 = vld [vmem:[#allocation2 + $0x30] sm:$0xff]
    %v48 = vld [vmem:[#allocation2 + $0x38] sm:$0xff]
    %v50 = vlaneseq
    %v51 = vshrl.u32 %v50, 7
    %v52 = vsub.s32 0, %v51
    %v53 = vrot.slane %v40, %v52
    %v54 = vlaneseq
    %v55 = vshrl.u32 %v54, 7
    %v56 = vsub.s32 1, %v55
    %v57 = vrot.slane %v40, %v56
    %v58 = vlaneseq
    %v59 = vshrl.u32 %v58, 7
    %v60 = vsub.s32 2, %v59
    %v61 = vrot.slane %v40, %v60
    %v62 = vlaneseq
    %v63 = vshrl.u32 %v62, 7
    %v64 = vsub.s32 3, %v63
    %v65 = vrot.slane %v40, %v64
    %v70 = vmul.f32 %v41, %v53
    %v71 = vmul.f32 %v42, %v57
    %v72 = vmul.f32 %v43, %v61
    %v73 = vmul.f32 %v44, %v65
    %v74 = vmul.f32 %v45, %v53
    %v75 = vmul.f32 %v46, %v57
    %v76 = vmul.f32 %v47, %v61
    %v77 = vmul.f32 %v48, %v65
    %v79 = vlaneseq
    %v80 = vshrl.u32 %v79, 7
    %v81 = vsub.s32 0, %v80
    %v82 = vrot.slane %v38, %v81
    %v83 = vlaneseq
    %v84 = vshrl.u32 %v83, 7
    %v85 = vsub.s32 1, %v84
    %v86 = vrot.slane %v38, %v85
    %v87 = vlaneseq
    %v88 = vshrl.u32 %v87, 7
    %v89 = vsub.s32 2, %v88
    %v90 = vrot.slane %v38, %v89
    %v91 = vlaneseq
    %v92 = vshrl.u32 %v91, 7
    %v93 = vsub.s32 3, %v92
    %v94 = vrot.slane %v38, %v93
    %v99 = vadd.f32 %v82, %v70
    %v100 = vadd.f32 %v86, %v71
    %v101 = vadd.f32 %v90, %v72
    %v102 = vadd.f32 %v94, %v73
    %v103 = vadd.f32 %v82, %v74
    %v104 = vadd.f32 %v86, %v75
    %v105 = vadd.f32 %v90, %v76
    %v106 = vadd.f32 %v94, %v77
    %107 = vst [vmem:[#allocation7] sm:$0xff] %v99
    %108 = vst [vmem:[#allocation7 + $0x8] sm:$0xff] %v100
    %109 = vst [vmem:[#allocation7 + $0x10] sm:$0xff] %v101
    %110 = vst [vmem:[#allocation7 + $0x18] sm:$0xff] %v102
    %111 = vst [vmem:[#allocation7 + $0x20] sm:$0xff] %v103
    %112 = vst [vmem:[#allocation7 + $0x28] sm:$0xff] %v104
    %113 = vst [vmem:[#allocation7 + $0x30] sm:$0xff] %v105
    %114 = vst [vmem:[#allocation7 + $0x38] sm:$0xff] %v106
    // Predicated region
    $region18: #{tpu_custom_call.1} parent=1 // pred_check
      _
    $region19: #{tpu_custom_call.1} parent=1 // pred_check_branch
      %116 = sbr.rel (0) target = $region21
    $region20: #{tpu_custom_call.1} parent=1 // pred_region
      %s118 = ssub.s32 1024, 1024
      %119 = vsyncadd [#allocation4], %s118
      %s120 = sshll.u32 [#allocation7], 4
      %s121 = int_to_ptr.vmem [resolvable:$true] %s120
      %126 = dma.vmem_to_hbm [thread:$0]  %s121, 1024, %s2, [#allocation4], 512, 512, 32
    $region21: #{tpu_custom_call.1} parent=1 // pred_fallthru
      _
    // Predicated region
    $region22: #{tpu_custom_call.1} parent=1 // pred_check
      _
    $region23: #{tpu_custom_call.1} parent=1 // pred_check_branch
      %128 = sbr.rel (0) target = $region25
    $region24: #{tpu_custom_call.1} parent=1 // pred_region
      %129 = dma.done [#allocation4], 1024
    $region25: #{tpu_custom_call.1} parent=1 // pred_fallthru
      _
    %130 = vsyncpa [#allocation3], 1
    %131 = vsyncpa [#allocation6], 1
    %132 = vsyncpa [#allocation4], 1

</llo_original>
